<compile_context>
chip_gen: v7x
topology: tpu7x:2x2x1
jax: 0.10.0
libtpu: 0.0.40
codegen_flags: <defaults>
</compile_context>

<pallas_src>
import functools

import jax
import jax.numpy as jnp
import numpy as np
from jax.experimental import pallas as pl
from jax.experimental.pallas import tpu as pltpu

# dtype of large HBM intermediates and MXU operands (xg, seq, embedding, W_ih, W_hh).
# Gate math, h/c state and matmul accumulation are always f32.  Set to jnp.float32 for
# bit-tight parity with an f32 reference.
STORAGE_DTYPE = jnp.bfloat16

# Scoped-VMEM limit requested from Mosaic (safe on v5e/v6e 128 MiB and v7x 64 MiB), and
# the (smaller) budget the chunk/tile auto-sizing targets.
VMEM_LIMIT_BYTES = 48 * 1024 * 1024
VMEM_BUDGET_BYTES = 36 * 1024 * 1024


def _sigmoid(x):
    # sigmoid(x) = 0.5 * (1 + tanh(x/2)): one EUP tanh + VPU fma instead of exp + div.
    return 0.5 * (jnp.tanh(0.5 * x) + 1.0)


# --------------------------- generic linear kernel ----------------------------
def _linear_kernel(x_ref, w_ref, b_ref, o_ref):
    y = jnp.dot(x_ref[...], w_ref[...], preferred_element_type=jnp.float32)
    y = y + b_ref[...]
    o_ref[...] = y.astype(o_ref.dtype)


def linear(x, w, b, *, out_dtype, row_tile=512):
    """y = x @ w + b.  x: (N, K); w: (K, M); b: (1, M) f32.  f32 accumulation.

    Trailing partial row blocks (N % row_tile != 0) compute on padded rows; the
    writeback is masked by Pallas so results stay correct.
    """
    N, K = x.shape
    M = w.shape[-1]
    rt = min(N, row_tile)
    grid = (pl.cdiv(N, rt),)
    return pl.pallas_call(
        _linear_kernel,
        out_shape=jax.ShapeDtypeStruct((N, M), out_dtype),
        grid_spec=pltpu.PrefetchScalarGridSpec(
            num_scalar_prefetch=0,
            grid=grid,
            in_specs=[
                pl.BlockSpec((rt, K), lambda i: (i, 0)),
                pl.BlockSpec((K, M), lambda i: (0, 0)),
                pl.BlockSpec((1, M), lambda i: (0, 0)),
            ],
            out_specs=pl.BlockSpec((rt, M), lambda i: (i, 0)),
        ),
        compiler_params=pltpu.CompilerParams(
            dimension_semantics=("parallel",),
            vmem_limit_bytes=VMEM_LIMIT_BYTES),
    )(x, w, b)


# ----------------------------- LSTM recurrence kernel -------------------------
def _lstm_chunk_kernel(*refs, with_seq_out, with_head, unroll):
    n_in = 4 + (2 if with_head else 0)
    in_refs, out_refs = refs[:n_in], refs[n_in:]
    xg_ref, whh_ref, h0_ref, c0_ref = in_refs[:4]
    if with_head:
        fcw_ref, fcb_ref = in_refs[4:6]
    k = 0
    seq_ref = None
    if with_seq_out:
        seq_ref = out_refs[k]
        k += 1
    hN_ref, cN_ref = out_refs[k], out_refs[k + 1]
    if with_head:
        head_ref = out_refs[k + 2]

    # hN/cN are resident (constant index across the inner "arbitrary" chunk axis) and
    # double as the running recurrence state carried between chunks.
    @pl.when(pl.program_id(1) == 0)
    def _():
        hN_ref[...] = h0_ref[...]
        cN_ref[...] = c0_ref[...]

    H = hN_ref.shape[-1]
    Tc = xg_ref.shape[0]
    whh = whh_ref[...]                      # hoisted: read once per chunk (storage dtype)

    def step(t, carry):
        h, c = carry                        # f32 state
        gates = xg_ref[t].astype(jnp.float32) + jnp.dot(
            h.astype(whh.dtype), whh, preferred_element_type=jnp.float32)   # (B, 4H)
        i_g = _sigmoid(gates[:, 0 * H:1 * H])
        f_g = _sigmoid(gates[:, 1 * H:2 * H])
        g_g = jnp.tanh(gates[:, 2 * H:3 * H])
        o_g = _sigmoid(gates[:, 3 * H:4 * H])
        c_new = f_g * c + i_g * g_g
        h_new = o_g * jnp.tanh(c_new)
        if with_seq_out:
            seq_ref[t] = h_new.astype(seq_ref.dtype)
        return (h_new, c_new)

    h_fin, c_fin = jax.lax.fori_loop(0, Tc, step, (hN_ref[...], cN_ref[...]),
                                     unroll=unroll)
    # Final-state write once per chunk (not once per step).
    hN_ref[...] = h_fin
    cN_ref[...] = c_fin

    if with_head:
        # Fused fc + sigmoid head on the final hidden state (last chunk only).
        @pl.when(pl.program_id(1) == pl.num_programs(1) - 1)
        def _():
            logits = jnp.dot(h_fin.astype(fcw_ref.dtype), fcw_ref[...],
                             preferred_element_type=jnp.float32) + fcb_ref[...]
            head_ref[...] = _sigmoid(logits).astype(head_ref.dtype)


def _choose_time_chunk(T, B, H, *, itemsize, with_seq_out,
                       budget_bytes=VMEM_BUDGET_BYTES, max_steps=32):
    """Largest divisor of T, preferring >= 2 chunks (so the xg DMA pipelines behind the
    recurrence), capped at max_steps (vreg pressure of the unrolled step loop), whose
    double-buffered blocks fit the VMEM budget."""
    def fits(tc):
        need = 2 * tc * B * 4 * H * itemsize          # xg chunk, double buffered
        if with_seq_out:
            need += 2 * tc * B * H * itemsize         # seq chunk, double buffered
        return need <= budget_bytes

    divisors = [d for d in range(1, T + 1) if T % d == 0]
    for pool in (
        [d for d in divisors if d < T and d <= max_steps and fits(d)],   # pipelined
        [d for d in divisors if d <= max_steps and fits(d)],
        [d for d in divisors if fits(d)],
    ):
        if pool:
            return max(pool)
    return 1


def lstm_recurrence(xg_tb4h, h0, c0, w_hh, *, fc_w=None, fc_b=None,
                    with_seq_out=True, time_chunk=None, batch_splits=1):
    """Serial LSTM recurrence over precomputed input gates.

    xg_tb4h: (T, B, 4H) = x @ W_ih + (b_ih + b_hh), time-major, STORAGE_DTYPE.
    h0, c0 : (B, H) f32.  w_hh: (H, 4H) STORAGE_DTYPE.
    fc_w/fc_b: optional (H, Opad)/(1, Opad) f32 -> fused sigmoid(fc(h_final)) head.
    batch_splits: 2 on v7x shards the recurrence over both TensorCores (requires
      (B // batch_splits) % 8 == 0); keep 1 on v5e/v6e (single TC, pure overhead).
    Returns (seq (T,B,H) or None, hN (B,H), cN (B,H), head (B,Opad) or None).
    """
    T, B, G = xg_tb4h.shape
    H = h0.shape[-1]
    assert G == 4 * H
    with_head = fc_w is not None
    nb = batch_splits
    assert B % nb == 0
    Bs = B // nb
    assert nb == 1 or Bs % 8 == 0, "batch shard must keep the sublane dim 8-aligned"

    tc = time_chunk if time_chunk is not None else _choose_time_chunk(
        T, Bs, H, itemsize=jnp.dtype(xg_tb4h.dtype).itemsize,
        with_seq_out=with_seq_out)
    assert T % tc == 0
    n_chunks = T // tc
    unroll = tc if tc <= 8 else 8          # partial unroll: LLO visibility w/o vreg spill

    in_specs = [
        pl.BlockSpec((tc, Bs, G), lambda b, c: (c, b, 0)),   # precomputed gates chunk
        pl.BlockSpec((H, G), lambda b, c: (0, 0)),           # W_hh (resident)
        pl.BlockSpec((Bs, H), lambda b, c: (b, 0)),          # h0
        pl.BlockSpec((Bs, H), lambda b, c: (b, 0)),          # c0
    ]
    # TODO(synk): on v7x, mark the constant-index weight specs pipeline_mode=pl.Buffered(1)
    # to drop their second pipeline buffer and buy back VMEM for a larger time_chunk.
    args = [xg_tb4h, w_hh, h0, c0]
    if with_head:
        Opad = fc_w.shape[-1]
        in_specs += [
            pl.BlockSpec((H, Opad), lambda b, c: (0, 0)),
            pl.BlockSpec((1, Opad), lambda b, c: (0, 0)),
        ]
        args += [fc_w, fc_b]

    out_specs, out_shape = [], []
    if with_seq_out:
        out_specs.append(pl.BlockSpec((tc, Bs, H), lambda b, c: (c, b, 0)))
        out_shape.append(jax.ShapeDtypeStruct((T, B, H), xg_tb4h.dtype))
    out_specs += [pl.BlockSpec((Bs, H), lambda b, c: (b, 0)),
                  pl.BlockSpec((Bs, H), lambda b, c: (b, 0))]
    out_shape += [jax.ShapeDtypeStruct((B, H), jnp.float32),
                  jax.ShapeDtypeStruct((B, H), jnp.float32)]
    if with_head:
        out_specs.append(pl.BlockSpec((Bs, Opad), lambda b, c: (b, 0)))
        out_shape.append(jax.ShapeDtypeStruct((B, Opad), jnp.float32))

    results = pl.pallas_call(
        functools.partial(_lstm_chunk_kernel, with_seq_out=with_seq_out,
                          with_head=with_head, unroll=unroll),
        grid_spec=pltpu.PrefetchScalarGridSpec(
            num_scalar_prefetch=0,
            grid=(nb, n_chunks),
            in_specs=in_specs,
            out_specs=out_specs,
        ),
        out_shape=tuple(out_shape),
        compiler_params=pltpu.CompilerParams(
            dimension_semantics=("parallel", "arbitrary"),   # time is a serial carry
            vmem_limit_bytes=VMEM_LIMIT_BYTES),
    )(*args)

    results = list(results)
    seq = results.pop(0) if with_seq_out else None
    hN = results.pop(0)
    cN = results.pop(0)
    head = results.pop(0) if with_head else None
    return seq, hN, cN, head


# ------------------------------ Full forward ----------------------------------
def sentiment_rnn_forward(params, x_ids, hidden, *, batch_splits=1):
    """x_ids: (B, T) int32.  hidden: (h0, c0) each (nLayers, B, H) f32.
    Returns (sigmoid_out (B,), (h_n, c_n)).  Eval mode: dropout(0.2) is identity."""
    h0_all, c0_all = hidden
    B, T = x_ids.shape
    n_layers = len(params["lstm"])
    H = h0_all.shape[-1]

    # Embedding gather directly in TIME-MAJOR order (no (B,T,E) materialize+transpose
    # round trip through HBM); table streamed in STORAGE_DTYPE.
    # TODO(synk): fully fuse the gather into the layer-0 projection via scalar-prefetched
    # row ids + pl.Element row indexing on the embedding table.
    emb = params["embedding"].astype(STORAGE_DTYPE)
    layer_in = jnp.take(emb, x_ids.T, axis=0)                        # (T, B, E)

    # Lane-pad the O=1 head so the fused in-kernel store is unmasked; the real column
    # is sliced out below.  TODO(synk): pre-pad/pre-cast params once outside the forward.
    O = params["fc_w"].shape[-1]
    Opad = max(O, 128)
    fc_w = jnp.zeros((H, Opad), jnp.float32).at[:, :O].set(params["fc_w"])
    fc_b = jnp.zeros((1, Opad), jnp.float32).at[:, :O].set(params["fc_b"])

    hs, cs, head = [], [], None
    for l in range(n_layers):
        w_ih, w_hh, b = params["lstm"][l]
        T_, B_, E_in = layer_in.shape
        # Hoisted input projection: one large lane-dense matmul, bias folded in,
        # output stored in STORAGE_DTYPE (this path is memory-bound).
        xg = linear(layer_in.reshape(T_ * B_, E_in),
                    w_ih.astype(STORAGE_DTYPE), b,
                    out_dtype=STORAGE_DTYPE)                         # (T*B, 4H)
        xg = xg.reshape(T_, B_, 4 * H)
        last = (l == n_layers - 1)
        seq, hN, cN, head = lstm_recurrence(
            xg, h0_all[l], c0_all[l], w_hh.astype(STORAGE_DTYPE),
            fc_w=fc_w if last else None, fc_b=fc_b if last else None,
            with_seq_out=not last, batch_splits=batch_splits)
        hs.append(hN)
        cs.append(cN)
        layer_in = seq                                               # None on last layer
    h_n = jnp.stack(hs, axis=0)
    c_n = jnp.stack(cs, axis=0)

    # Dropout(0.2) is identity in eval, and only the last-time-step row of the original
    # (B*T, O) FC output is consumed; that row equals fc(hN_last), which the fused
    # in-kernel head already computed.  NOTE: this shortcut breaks if training-mode
    # dropout or non-last-step outputs are ever needed.
    sigmoid_out = head[:, O - 1]                                     # (B,)
    return sigmoid_out, (h_n, c_n)


# ------------------------------ Param init ------------------------------------
def init_params(key, vocab_size, embedding_dim, hidden_dim, n_layers, output_size):
    keys = jax.random.split(key, 3 + 4 * n_layers)
    params = {}
    params["embedding"] = 0.1 * jax.random.normal(
        keys[0], (vocab_size, embedding_dim), jnp.float32)
    lstm = []
    kidx = 1
    in_dim = embedding_dim
    for _ in range(n_layers):
        w_ih = 0.1 * jax.random.normal(keys[kidx], (in_dim, 4 * hidden_dim), jnp.float32)
        w_hh = 0.1 * jax.random.normal(keys[kidx + 1], (hidden_dim, 4 * hidden_dim), jnp.float32)
        b_ih = 0.1 * jax.random.normal(keys[kidx + 2], (4 * hidden_dim,), jnp.float32)
        b_hh = 0.1 * jax.random.normal(keys[kidx + 3], (4 * hidden_dim,), jnp.float32)
        lstm.append((w_ih, w_hh, (b_ih + b_hh).reshape(1, 4 * hidden_dim)))
        kidx += 4
        in_dim = hidden_dim
    params["lstm"] = lstm
    params["fc_w"] = 0.1 * jax.random.normal(keys[kidx], (hidden_dim, output_size), jnp.float32)
    params["fc_b"] = 0.1 * jax.random.normal(keys[kidx + 1], (1, output_size), jnp.float32)
    return params


# --------------------------- Pure-JAX f32 reference ---------------------------
def _reference_forward(params, x_ids, hidden):
    h0_all, c0_all = hidden
    B, T = x_ids.shape
    H = h0_all.shape[-1]
    embeds = jnp.take(params["embedding"], x_ids, axis=0)
    layer_in = jnp.transpose(embeds, (1, 0, 2))
    hs, cs = [], []
    for l, (w_ih, w_hh, b) in enumerate(params["lstm"]):
        def step(carry, x_t):
            h, c = carry
            gates = x_t @ w_ih + h @ w_hh + b
            i = jax.nn.sigmoid(gates[:, 0 * H:1 * H])
            f = jax.nn.sigmoid(gates[:, 1 * H:2 * H])
            g = jnp.tanh(gates[:, 2 * H:3 * H])
            o = jax.nn.sigmoid(gates[:, 3 * H:4 * H])
            c = f * c + i * g
            h = o * jnp.tanh(c)
            return (h, c), h
        (hN, cN), outs = jax.lax.scan(step, (h0_all[l], c0_all[l]), layer_in)
        hs.append(hN)
        cs.append(cN)
        layer_in = outs
    lstm_out = jnp.transpose(layer_in, (1, 0, 2)).reshape(B * T, H)
    out = jax.nn.sigmoid(lstm_out @ params["fc_w"] + params["fc_b"])
    return out.reshape(B, -1)[:, -1], (jnp.stack(hs, 0), jnp.stack(cs, 0))


if __name__ == "__main__":
    # Small, forward-consistent shapes (real model: B=200, T~200, E=512, H=256).
    B, T = 2, 8
    VOCAB, E, H, NL, OUT = 50, 32, 32, 2, 1

    key = jax.random.PRNGKey(0)
    k_params, k_ids = jax.random.split(key)
    params = init_params(k_params, VOCAB, E, H, NL, OUT)

    x_ids = jax.random.randint(k_ids, (B, T), 0, VOCAB, dtype=jnp.int32)
    hidden = (jnp.zeros((NL, B, H), jnp.float32), jnp.zeros((NL, B, H), jnp.float32))

    sig_out, (h_n, c_n) = sentiment_rnn_forward(params, x_ids, hidden)
    jax.block_until_ready((sig_out, h_n, c_n))

    ref_out, (ref_h, ref_c) = _reference_forward(params, x_ids, hidden)
    # bf16 storage of xg/seq/weights -> loosened tolerance vs. the f32 reference.
    np.testing.assert_allclose(np.asarray(sig_out), np.asarray(ref_out), rtol=2e-2, atol=2e-2)
    np.testing.assert_allclose(np.asarray(h_n), np.asarray(ref_h), rtol=2e-2, atol=2e-2)
    np.testing.assert_allclose(np.asarray(c_n), np.asarray(ref_c), rtol=2e-2, atol=2e-2)

    assert sig_out.shape == (B,)
    assert h_n.shape == (NL, B, H) and c_n.shape == (NL, B, H)
    print("KERNEL_OK")
</pallas_src>

<mosaic_0001>
module attributes {stable_mosaic.version = 11 : i64} {
  func.func @_linear_kernel(%arg0: i32, %arg1: memref<16x32xbf16, #tpu.memory_space<vmem>>, %arg2: memref<32x128xbf16, #tpu.memory_space<vmem>>, %arg3: memref<1x128xf32, #tpu.memory_space<vmem>>, %arg4: memref<16x128xbf16, #tpu.memory_space<vmem>>) attributes {dimension_semantics = [#tpu.dimension_semantics<parallel>], iteration_bounds = array<i64: 1>, scalar_prefetch = 0 : i64, scratch_operands = 0 : i64, tpu.core_type = #tpu.core_type<tc>, window_params = [{transform_indices = @transform_0, window_bounds = array<i64: 16, 32>}, {pipeline_mode = #tpu.pipeline_mode<synchronous>, transform_indices = @transform_1, window_bounds = array<i64: 32, 128>}, {pipeline_mode = #tpu.pipeline_mode<synchronous>, transform_indices = @transform_2, window_bounds = array<i64: 1, 128>}, {transform_indices = @transform_3, window_bounds = array<i64: 16, 128>}]} {
    %c0 = arith.constant 0 : index
    %c0_0 = arith.constant 0 : index
    %0 = vector.load %arg1[%c0, %c0_0] : memref<16x32xbf16, #tpu.memory_space<vmem>>, vector<16x32xbf16>
    %c0_1 = arith.constant 0 : index
    %c0_2 = arith.constant 0 : index
    %1 = vector.load %arg2[%c0_1, %c0_2] : memref<32x128xbf16, #tpu.memory_space<vmem>>, vector<32x128xbf16>
    %cst = arith.constant dense<0.000000e+00> : vector<16x128xf32>
    %2 = tpu.matmul %0, %1, %cst {dimension_numbers = #tpu.dot_dimension_numbers<[1], [0], [0], [1], [0, 0, 1, 1], [], []>} : vector<16x32xbf16>, vector<32x128xbf16>, vector<16x128xf32> -> vector<16x128xf32>
    %c0_3 = arith.constant 0 : index
    %c0_4 = arith.constant 0 : index
    %3 = vector.load %arg3[%c0_3, %c0_4] : memref<1x128xf32, #tpu.memory_space<vmem>>, vector<1x128xf32>
    %4 = vector.broadcast %3 : vector<1x128xf32> to vector<16x128xf32>
    %5 = arith.addf %2, %4 : vector<16x128xf32>
    %6 = arith.truncf %5 : vector<16x128xf32> to vector<16x128xbf16>
    %c0_5 = arith.constant 0 : index
    %c0_6 = arith.constant 0 : index
    %7 = vector.load %arg4[%c0_5, %c0_6] : memref<16x128xbf16, #tpu.memory_space<vmem>>, vector<16x128xbf16>
    tpu.vector_store %arg4[%c0_5, %c0_6], %6 {strides = array<i32>} : memref<16x128xbf16, #tpu.memory_space<vmem>>, vector<16x128xbf16>,
    return
  }
  func.func @transform_0(%arg0: i32) -> (i32, i32) {
    %c0_i32 = arith.constant 0 : i32
    %c0_i32_0 = arith.constant 0 : i32
    return %arg0, %c0_i32 : i32, i32
  }
  func.func @transform_1(%arg0: i32) -> (i32, i32) {
    %c0_i32 = arith.constant 0 : i32
    %c0_i32_0 = arith.constant 0 : i32
    %c0_i32_1 = arith.constant 0 : i32
    return %c0_i32, %c0_i32_0 : i32, i32
  }
  func.func @transform_2(%arg0: i32) -> (i32, i32) {
    %c0_i32 = arith.constant 0 : i32
    %c0_i32_0 = arith.constant 0 : i32
    %c0_i32_1 = arith.constant 0 : i32
    return %c0_i32, %c0_i32_0 : i32, i32
  }
  func.func @transform_3(%arg0: i32) -> (i32, i32) {
    %c0_i32 = arith.constant 0 : i32
    %c0_i32_0 = arith.constant 0 : i32
    return %arg0, %c0_i32 : i32, i32
  }
}

</mosaic_0001>

<llo_original>
// kernel: tpu_custom_call.1
$region0: #{tpu_custom_call.1}
  #allocation0 [shape = 'u32[]', space=smem, size = 0x4, offset = 0x4, fixed_abs, tag = 'smem constant byte address 0x4 - core index']
  #allocation1 [shape = 'u32[144,128]{1,0:T(1,128)}', space=vmem, size = 0x12000, scoped, tag = 'internal scratch']
  %s0 = inlined_call_operand.hbm [shape: bf16[16,32], index: 0, kind: input, shape index: {}]
  %s1 = inlined_call_operand.hbm [shape: bf16[32,128], index: 1, kind: input, shape index: {}]
  %s2 = inlined_call_operand.vmem [shape: f32[1,128], index: 2, kind: input, shape index: {}]
  %s3 = inlined_call_operand.hbm [shape: bf16[16,128], index: 3, kind: output, shape index: {}]
  %s4 = sld [smem:[#allocation0]]
  $region30: #{tpu_custom_call.1} parent=0
    _
  %s6 = ssub.s32 1, %s4
  %s7 = scalar_select 0, %s6, %s4
  $region1: #{tpu_custom_call.1} parent=0
    #allocation2 [shape = 'u8[4096]{0}', space=vmem, size = 0x1000, scoped, tag = 'input window, operand 0, single buffered']
    #allocation3 [shape = 's32[1]{0}', space=sflag, size = 0x4, scoped, tag = 'scoped memory for tpu_custom_call.1']
    #allocation4 [shape = 's32[1]{0}', space=sflag, size = 0x4, scoped, tag = 'scoped memory for tpu_custom_call.1']
    #allocation5 [shape = 'u8[8192]{0}', space=vmem, size = 0x2000, scoped, tag = 'input window, operand 1, single buffered']
    #allocation6 [shape = 's32[1]{0}', space=sflag, size = 0x4, scoped, tag = 'scoped memory for tpu_custom_call.1']
    #allocation7 [shape = 'u8[4096]{0}', space=vmem, size = 0x1000, scoped, tag = 'output window, operand 0, single buffered']
    %8 = vsyncpa [#allocation3], 0
    %9 = vsyncpa [#allocation6], 0
    %10 = vsyncpa [#allocation4], 0
    // Predicated region
    $region2: #{tpu_custom_call.1} parent=1 // pred_check
      _
    $region3: #{tpu_custom_call.1} parent=1 // pred_check_branch
      %12 = sbr.rel (0) target = $region5
    $region4: #{tpu_custom_call.1} parent=1 // pred_region
      %s14 = ssub.s32 128, 128
      %15 = vsyncadd [#allocation3], %s14
      %s16 = sshll.u32 [#allocation2], 4
      %s17 = int_to_ptr.vmem [resolvable:$true] %s16
      %22 = dma.hbm_to_vmem [thread:$0]  %s0, 128, %s17, [#allocation3], 64, 64, 4
    $region5: #{tpu_custom_call.1} parent=1 // pred_fallthru
      _
    // Predicated region
    $region6: #{tpu_custom_call.1} parent=1 // pred_check
      _
    $region7: #{tpu_custom_call.1} parent=1 // pred_check_branch
      %24 = sbr.rel (0) target = $region9
    $region8: #{tpu_custom_call.1} parent=1 // pred_region
      %s26 = ssub.s32 256, 256
      %27 = vsyncadd [#allocation6], %s26
      %s28 = sshll.u32 [#allocation5], 4
      %s29 = int_to_ptr.vmem [resolvable:$true] %s28
      %34 = dma.hbm_to_vmem [thread:$0]  %s1, 256, %s29, [#allocation6], 64, 64, 4
    $region9: #{tpu_custom_call.1} parent=1 // pred_fallthru
      _
    // Predicated region
    $region10: #{tpu_custom_call.1} parent=1 // pred_check
      _
    $region11: #{tpu_custom_call.1} parent=1 // pred_check_branch
      %36 = sbr.rel (0) target = $region13
    $region12: #{tpu_custom_call.1} parent=1 // pred_region
      _
    $region13: #{tpu_custom_call.1} parent=1 // pred_fallthru
      _
    // Predicated region
    $region14: #{tpu_custom_call.1} parent=1 // pred_check
      _
    $region15: #{tpu_custom_call.1} parent=1 // pred_check_branch
      %38 = sbr.rel (0) target = $region17
    $region16: #{tpu_custom_call.1} parent=1 // pred_region
      %39 = dma.done [#allocation3], 128
    $region17: #{tpu_custom_call.1} parent=1 // pred_fallthru
      _
    // Predicated region
    $region18: #{tpu_custom_call.1} parent=1 // pred_check
      _
    $region19: #{tpu_custom_call.1} parent=1 // pred_check_branch
      %41 = sbr.rel (0) target = $region21
    $region20: #{tpu_custom_call.1} parent=1 // pred_region
      %42 = dma.done [#allocation6], 256
    $region21: #{tpu_custom_call.1} parent=1 // pred_fallthru
      _
    %v44 = vld [vmem:[#allocation2] sm:$0xf]
    %v45 = vld [vmem:[#allocation2 + $0x4] sm:$0xf]
    %v46 = vld [vmem:[#allocation5] sm:$0xf]
    %v47 = vld [vmem:[#allocation5 + $0x4] sm:$0xf]
    %v48 = vld [vmem:[#allocation5 + $0x8] sm:$0xf]
    %v49 = vld [vmem:[#allocation5 + $0xc] sm:$0xf]
    %v50 = vld [vmem:[%s2] sm:$0x1]
    %v52 = vlaneseq
    %v53 = vshrl.u32 %v52, 7
    %v54 = vsub.s32 0, %v53
    %v55 = vrot.slane %v50, %v54
    %v59 = vunpack.c.l.b16 %v44
    %v60 = vunpack.c.l.b16 %v45
    %v61 = vpack.c.b16 %v60, %v59
    %v66 = vunpack.c.l.b16 %v46
    %v67 = vunpack.c.l.b16 %v47
    %v68 = vunpack.c.l.b16 %v48
    %v69 = vunpack.c.l.b16 %v49
    %v70 = vpack.c.b16 %v67, %v66
    %v71 = vpack.c.b16 %v69, %v68
    %vm74 = vcmask 261120
    %v76 = vsel %vm74, %v61, 0
    %78 = vmatprep.subr.bf16.mxu0 0
    %79 = vmatpush1.bf16.msra.mxu0 %v70
    %80 = vmatprep.subr.bf16.mxu0 0
    %81 = vmatpush1.bf16.msra.mxu0 %v71
    %82 = vmatprep.subr.bf16.mxu0 0
    %83 = vmatpush1.bf16.msra.mxu0 0
    %84 = vmatprep.subr.bf16.mxu0 0
    %85 = vmatpush1.bf16.msra.mxu0 0
    %86 = vmatprep.subr.bf16.mxu0 0
    %87 = vmatpush1.bf16.msra.mxu0 0
    %88 = vmatprep.subr.bf16.mxu0 0
    %89 = vmatpush1.bf16.msra.mxu0 0
    %90 = vmatprep.subr.bf16.mxu0 0
    %91 = vmatpush1.bf16.msra.mxu0 0
    %92 = vmatprep.subr.bf16.mxu0 0
    %93 = vmatpush1.bf16.msra.mxu0 0
    %94 = vmatprep.subr.bf16.mxu0 0
    %95 = vmatpush1.bf16.msra.mxu0 0
    %96 = vmatprep.subr.bf16.mxu0 0
    %97 = vmatpush1.bf16.msra.mxu0 0
    %98 = vmatprep.subr.bf16.mxu0 0
    %99 = vmatpush1.bf16.msra.mxu0 0
    %100 = vmatprep.subr.bf16.mxu0 0
    %101 = vmatpush1.bf16.msra.mxu0 0
    %102 = vmatprep.subr.bf16.mxu0 0
    %103 = vmatpush1.bf16.msra.mxu0 0
    %104 = vmatprep.subr.bf16.mxu0 0
    %105 = vmatpush1.bf16.msra.mxu0 0
    %106 = vmatprep.subr.bf16.mxu0 0
    %107 = vmatpush1.bf16.msra.mxu0 0
    %108 = vmatprep.subr.bf16.mxu0 0
    %109 = vmatpush1.bf16.msra.mxu0 0
    %110 = vmatprep.mubr.bf16.mxu0 0
    %111 = vmatmul.mubr.bf16.gmra.mrb[0].mxu0 %v76
    %v112 = vpop.f32.mrb[0].mxu0
    %v113 = vadd.f32 %v55, %v112
    %v114 = vpop.f32.mrb[0].mxu0
    %v115 = vpop.f32.mrb[0].mxu0
    %v116 = vadd.f32 %v55, %v115
    %v117 = vpop.f32.mrb[0].mxu0
    %118 = vdwg.mxu0
    %v119 = vpack.c.bf16 %v116, %v113
    %v121 = vunpack.c.l.b16 %v119
    %v122 = vunpack.c.h.b16 %v119
    %v123 = vpack.c.b16 %v121, %v121
    %v124 = vpack.c.b16 %v122, %v122
    %127 = vst [vmem:[#allocation7] sm:$0xf] %v123
    %128 = vst [vmem:[#allocation7 + $0x4] sm:$0xf] %v124
    // Predicated region
    $region22: #{tpu_custom_call.1} parent=1 // pred_check
      _
    $region23: #{tpu_custom_call.1} parent=1 // pred_check_branch
      %130 = sbr.rel (0) target = $region25
    $region24: #{tpu_custom_call.1} parent=1 // pred_region
      %s132 = ssub.s32 128, 128
      %133 = vsyncadd [#allocation4], %s132
      %s134 = sshll.u32 [#allocation7], 4
      %s135 = int_to_ptr.vmem [resolvable:$true] %s134
      %140 = dma.vmem_to_hbm [thread:$0]  %s135, 128, %s3, [#allocation4], 64, 64, 4
    $region25: #{tpu_custom_call.1} parent=1 // pred_fallthru
      _
    // Predicated region
    $region26: #{tpu_custom_call.1} parent=1 // pred_check
      _
    $region27: #{tpu_custom_call.1} parent=1 // pred_check_branch
      %142 = sbr.rel (0) target = $region29
    $region28: #{tpu_custom_call.1} parent=1 // pred_region
      %143 = dma.done [#allocation4], 128
    $region29: #{tpu_custom_call.1} parent=1 // pred_fallthru
      _
    %144 = vsyncpa [#allocation3], 1
    %145 = vsyncpa [#allocation6], 1
    %146 = vsyncpa [#allocation4], 1

</llo_original>
